<compile_context>
chip_gen: v5e
topology: v5e:2x2
jax: 0.10.0
libtpu: 0.0.40
codegen_flags: <defaults>
</compile_context>

<pallas_src>
import functools

import jax
import jax.numpy as jnp
from jax.experimental import pallas as pl
from jax.experimental.pallas import tpu as pltpu


def _round_up(v, m):
    return (v + m - 1) // m * m


def _vmem_budget():
    """(vmem_limit_bytes, per-block byte budget) tuned per TPU generation."""
    try:
        kind = jax.devices()[0].device_kind.lower()
    except Exception:  # pragma: no cover - defensive
        kind = ""
    if ("v5 lite" in kind or "v5e" in kind or "v5lite" in kind
            or "v6" in kind or "trillium" in kind):
        # 128 MiB physical VMEM: bigger tiles => fewer grid steps, longer DMAs.
        return 64 * 1024 * 1024, 4 << 20
    # Safe default (covers v7x with 64 MiB VMEM per TensorCore).
    return 32 * 1024 * 1024, 2 << 20


def _yolo_decode_kernel(x_ref, box_ref, *maybe_cls_ref, R, A, W, tc,
                        inv_w, inv_h, aw_scaled, ah_scaled, nc_fused):
    """Fused YOLO head decode on one spatial tile.

    x_ref   : (R, CH_in, tc)  raw logits, CH_in = 5+nc (or 5 on the extracted
                              path); channel c of row r is x_ref[r, c, :].
    box_ref : (5*R, tc)       packed [xs | ys | ws | hs | det] rows.
    maybe_cls_ref : [(R, nc, tc)] coreml class probabilities (if nc_fused>0).
    """
    cls_ref = maybe_cls_ref[0] if nc_fused else None
    f32 = jnp.float32

    # --- grid-cell offsets for this spatial tile, generated in-registers ----
    base = pl.program_id(0) * tc                       # static tc, scalar int
    lane = jax.lax.broadcasted_iota(jnp.int32, (1, tc), 1)
    s = (base + lane).astype(f32)                      # flat spatial index
    # Exact integer //W and %W done in f32 (avoids vector integer division).
    # Exact while H*W*W < 2**22, trivially true for YOLO grids.
    gy = jnp.floor((s + 0.5) * (1.0 / W))              # (1, tc)
    gx = s - gy * W                                    # (1, tc)

    # --- per-(batch, anchor)-row anchor scales, baked from Python floats ----
    rowf = jax.lax.broadcasted_iota(jnp.int32, (R, 1), 0).astype(f32)
    q = jnp.floor((rowf + 0.5) * (1.0 / A))
    aidx = rowf - q * A                                # == row % A, exactly
    aw = jnp.zeros((R, 1), f32)
    ah = jnp.zeros((R, 1), f32)
    for a in range(A):
        aw = jnp.where(aidx == float(a), jnp.float32(aw_scaled[a]), aw)
        ah = jnp.where(aidx == float(a), jnp.float32(ah_scaled[a]), ah)

    def ch(c):
        return x_ref[:, c, :].astype(f32)              # (R, tc)

    det = jax.nn.sigmoid(ch(4))                        # EUP transcendental
    od = box_ref.dtype
    box_ref[0 * R:1 * R, :] = ((jax.nn.sigmoid(ch(0)) + gx) * inv_w).astype(od)
    box_ref[1 * R:2 * R, :] = ((jax.nn.sigmoid(ch(1)) + gy) * inv_h).astype(od)
    box_ref[2 * R:3 * R, :] = (jnp.exp(ch(2)) * aw).astype(od)
    box_ref[3 * R:4 * R, :] = (jnp.exp(ch(3)) * ah).astype(od)
    box_ref[4 * R:5 * R, :] = det.astype(od)

    if nc_fused:
        cls = x_ref[:, 5:, :].astype(f32)              # (R, nc, tc)
        cls_ref[...] = (jax.nn.sigmoid(cls) * det[:, None, :]).astype(cls_ref.dtype)


class EagerYoloLayer:
    """JAX/Pallas mirror of the PyTorch EagerYoloLayer."""

    def __init__(self, batch_size, anchors, num_classes, in_channels,
                 height, width, coreml_mode):
        self.batch_size = batch_size
        self.anchors = list(anchors)
        self.num_anchors = len(anchors) // 2
        self.num_classes = num_classes
        self.in_channels = in_channels
        self.height = height
        self.width = width
        self.coreml_mode = coreml_mode
        assert in_channels == self.num_anchors * (5 + num_classes)
        self.grid_x, self.grid_y, self.anchor_w, self.anchor_h = self.create_grid()

    def __repr__(self):
        return ('EagerYoloLayer(num_classes: {}, anchors: {}, input: ({}x{}x{})))'
                .format(self.num_classes, self.anchors, self.in_channels,
                        self.height, self.width))

    def create_grid(self):
        """Flat grids/anchors, same layout as the torch module: len B*A*H*W."""
        B, A, H, W = self.batch_size, self.num_anchors, self.height, self.width
        s = jnp.arange(H * W, dtype=jnp.int32)
        gx = (s % W).astype(jnp.float32)
        gy = (s // W).astype(jnp.float32)
        grid_x = jnp.tile(gx, B * A)
        grid_y = jnp.tile(gy, B * A)
        a = jnp.asarray(self.anchors, dtype=jnp.float32).reshape(A, 2)
        anchor_w = jnp.repeat(jnp.tile(a[:, 0], B), H * W)
        anchor_h = jnp.repeat(jnp.tile(a[:, 1], B), H * W)
        return grid_x, grid_y, anchor_w, anchor_h

    def get_output_chw(self):
        return (self.in_channels, self.height, self.width)

    def get_output_tensor_length(self):
        return self.batch_size * self.in_channels * self.height * self.width

    def forward(self, x):
        B, A, nc = self.batch_size, self.num_anchors, self.num_classes
        H, W = self.height, self.width
        R, HW, CH = B * A, H * W, 5 + nc
        assert x.shape == (B, self.in_channels, H, W)
        dt = x.dtype
        itemsize = jnp.dtype(dt).itemsize

        HWp = _round_up(HW, 128)            # lane-dense padded spatial extent
        pad = HWp - HW
        nc_fused = nc if self.coreml_mode else 0

        x3 = x.reshape(R, CH, HW)           # free, contiguous reshape

        # Input layout: read the full channel slab in-kernel whenever that is
        # cheaper than an XLA extraction pass over the 5 box channels.
        full_input = self.coreml_mode or (CH <= 10)
        if full_input:
            x_in, ch_in = x3, CH
        else:
            x_in, ch_in = x3[:, :5, :], 5   # non-coreml, large nc
        if pad:
            # TODO(synk): use a ragged last spatial block instead of an XLA pad.
            x_in = jnp.pad(x_in, ((0, 0), (0, 0), (0, pad)))

        vmem_limit, block_budget = _vmem_budget()

        # Spatial tile: multiple of 128 lanes, exact divisor of HWp, sized to
        # the per-generation block budget, and >= 2 tiles when possible so
        # both v7x TensorCores get work and DMAs double-buffer.
        rows_vmem = (R * _round_up(ch_in, 8) + _round_up(5 * R, 8)
                     + (R * _round_up(nc_fused, 8) if nc_fused else 0))
        bytes_per_col = 2 * rows_vmem * max(itemsize, 4)
        tc = min(HWp, max(128, (block_budget // bytes_per_col) // 128 * 128))
        while HWp % tc:
            tc -= 128
        if HWp // tc < 2 and HWp >= 256:
            cand = (HWp // 2) // 128 * 128
            while cand >= 128 and HWp % cand:
                cand -= 128
            if cand >= 128:
                tc = cand
        n_tiles = HWp // tc

        aw_scaled = tuple(float(self.anchors[2 * a]) / W for a in range(A))
        ah_scaled = tuple(float(self.anchors[2 * a + 1]) / H for a in range(A))

        kernel = functools.partial(
            _yolo_decode_kernel,
            R=R, A=A, W=W, tc=tc,
            inv_w=1.0 / float(W), inv_h=1.0 / float(H),
            aw_scaled=aw_scaled, ah_scaled=ah_scaled,
            nc_fused=nc_fused,
        )

        in_specs = [pl.BlockSpec((R, ch_in, tc), lambda j: (0, 0, j))]
        out_shapes = [jax.ShapeDtypeStruct((5 * R, HWp), dt)]
        out_specs = [pl.BlockSpec((5 * R, tc), lambda j: (0, j))]
        if nc_fused:
            out_shapes.append(jax.ShapeDtypeStruct((R, nc, HWp), dt))
            out_specs.append(pl.BlockSpec((R, nc, tc), lambda j: (0, 0, j)))

        n_box = 5 * R * HWp
        n_cls = nc_fused * R * HWp
        cost = pl.CostEstimate(
            flops=10 * n_box + 3 * n_cls,
            transcendentals=n_box + n_cls,
            bytes_accessed=(R * ch_in * HWp + n_box + n_cls) * itemsize,
        )

        outs = pl.pallas_call(
            kernel,
            out_shape=tuple(out_shapes),
            grid=(n_tiles,),
            in_specs=in_specs,
            out_specs=tuple(out_specs),
            compiler_params=pltpu.CompilerParams(
                dimension_semantics=("parallel",),
                vmem_limit_bytes=vmem_limit,
            ),
            cost_estimate=cost,
        )(x_in)

        box_p = outs[0]
        Q = A * HW
        xs = box_p[0 * R:1 * R, :HW].reshape(B, Q)
        ys = box_p[1 * R:2 * R, :HW].reshape(B, Q)
        ws = box_p[2 * R:3 * R, :HW].reshape(B, Q)
        hs = box_p[3 * R:4 * R, :HW].reshape(B, Q)
        det_confs = box_p[4 * R:5 * R, :HW].reshape(B, Q)
        coordinates = jnp.stack([xs, ys, ws, hs], axis=2)        # (B, Q, 4)

        if self.coreml_mode:
            cp_p = outs[1]
            # (R, nc, HW) -> (B, Q, nc): pure layout transform, left to XLA.
            # (Only worth emitting in-kernel if nc were a multiple of 128.)
            class_probs = jnp.transpose(cp_p[:, :, :HW], (0, 2, 1)).reshape(B, Q, nc)
            return (coordinates, class_probs)
        # Non-coreml class scores are a pure layout transform (no math):
        # leave to XLA instead of an identity-copy Pallas kernel.
        class_scores = jnp.transpose(x3[:, 5:, :], (0, 2, 1)).reshape(B, Q, nc)
        return (coordinates, class_scores, det_confs)


# ------------------------- pure-JAX reference --------------------------------

def eager_yolo_reference(layer, x):
    """Direct transcription of the PyTorch forward (for verification)."""
    B, A, nc = layer.batch_size, layer.num_anchors, layer.num_classes
    H, W = layer.height, layer.width
    R, HW, CH = B * A, H * W, 5 + nc
    out = jnp.transpose(x.reshape(R, CH, HW), (1, 0, 2)).reshape(CH, R * HW)
    gx, gy, aw, ah = layer.grid_x, layer.grid_y, layer.anchor_w, layer.anchor_h
    xs = (jax.nn.sigmoid(out[0]) + gx) / W
    ys = (jax.nn.sigmoid(out[1]) + gy) / H
    ws = jnp.exp(out[2]) * aw / W
    hs = jnp.exp(out[3]) * ah / H
    dc = jax.nn.sigmoid(out[4])
    Q = A * HW
    coords = jnp.stack([xs.reshape(B, Q), ys.reshape(B, Q),
                        ws.reshape(B, Q), hs.reshape(B, Q)], axis=2)
    cls = jnp.transpose(out[5:], (1, 0)).reshape(B, Q, nc)
    if layer.coreml_mode:
        return (coords, jax.nn.sigmoid(cls) * dc.reshape(B, Q)[..., None])
    return (coords, cls, dc.reshape(B, Q))


# --------------------------------- main ---------------------------------------

if __name__ == "__main__":
    key = jax.random.PRNGKey(0)

    # Small shapes consistent with the module: 2 anchors, 3 classes ->
    # in_channels = 2 * (5 + 3) = 16, NCHW = (2, 16, 16, 16).
    B, num_classes = 2, 3
    anchors = [1.0, 2.0, 3.5, 1.25]
    A = len(anchors) // 2
    H = W = 16
    C = A * (5 + num_classes)
    x = jax.random.normal(key, (B, C, H, W), dtype=jnp.float32)

    for coreml_mode in (False, True):
        layer = EagerYoloLayer(B, anchors, num_classes, C, H, W, coreml_mode)
        got = jax.block_until_ready(layer.forward(x))
        want = eager_yolo_reference(layer, x)
        assert len(got) == len(want)
        for g, w in zip(got, want):
            assert g.shape == w.shape and g.dtype == w.dtype
            assert bool(jnp.allclose(g, w, atol=1e-5, rtol=1e-5)), \
                "mismatch (coreml_mode={})".format(coreml_mode)

    print("KERNEL_OK")
</pallas_src>

<mosaic_0001>
module attributes {stable_mosaic.version = 11 : i64} {
  func.func @_yolo_decode_kernel(%arg0: i32, %arg1: memref<4x8x128xf32, #tpu.memory_space<vmem>>, %arg2: memref<20x128xf32, #tpu.memory_space<vmem>>) attributes {dimension_semantics = [#tpu.dimension_semantics<parallel>], iteration_bounds = array<i64: 2>, scalar_prefetch = 0 : i64, scratch_operands = 0 : i64, tpu.core_type = #tpu.core_type<tc>, window_params = [{transform_indices = @transform_0, window_bounds = array<i64: 4, 8, 128>}, {transform_indices = @transform_1, window_bounds = array<i64: 20, 128>}]} {
    %c128_i32 = arith.constant 128 : i32
    %0 = arith.muli %arg0, %c128_i32 : i32
    %1 = tpu.iota {dimensions = array<i32: 1>} : vector<1x128xi32>
    %2 = vector.broadcast %0 : i32 to vector<1x128xi32>
    %3 = arith.addi %2, %1 : vector<1x128xi32>
    %4 = arith.sitofp %3 : vector<1x128xi32> to vector<1x128xf32>
    %cst = arith.constant 5.000000e-01 : f32
    %5 = vector.broadcast %cst : f32 to vector<1x128xf32>
    %6 = arith.addf %4, %5 : vector<1x128xf32>
    %cst_0 = arith.constant 6.250000e-02 : f32
    %7 = vector.broadcast %cst_0 : f32 to vector<1x128xf32>
    %8 = arith.mulf %6, %7 : vector<1x128xf32>
    %9 = math.floor %8 : vector<1x128xf32>
    %cst_1 = arith.constant 1.600000e+01 : f32
    %10 = vector.broadcast %cst_1 : f32 to vector<1x128xf32>
    %11 = arith.mulf %9, %10 : vector<1x128xf32>
    %12 = arith.subf %4, %11 : vector<1x128xf32>
    %13 = tpu.iota {dimensions = array<i32: 0>} : vector<4x1xi32>
    %14 = arith.sitofp %13 : vector<4x1xi32> to vector<4x1xf32>
    %cst_2 = arith.constant 5.000000e-01 : f32
    %15 = vector.broadcast %cst_2 : f32 to vector<4x1xf32>
    %16 = arith.addf %14, %15 : vector<4x1xf32>
    %cst_3 = arith.constant 5.000000e-01 : f32
    %17 = vector.broadcast %cst_3 : f32 to vector<4x1xf32>
    %18 = arith.mulf %16, %17 : vector<4x1xf32>
    %19 = math.floor %18 : vector<4x1xf32>
    %cst_4 = arith.constant 2.000000e+00 : f32
    %20 = vector.broadcast %cst_4 : f32 to vector<4x1xf32>
    %21 = arith.mulf %19, %20 : vector<4x1xf32>
    %22 = arith.subf %14, %21 : vector<4x1xf32>
    %cst_5 = arith.constant 0.000000e+00 : f32
    %23 = vector.broadcast %cst_5 : f32 to vector<4x1xf32>
    %cst_6 = arith.constant 0.000000e+00 : f32
    %24 = vector.broadcast %cst_6 : f32 to vector<4x1xf32>
    %cst_7 = arith.constant 0.000000e+00 : f32
    %25 = vector.broadcast %cst_7 : f32 to vector<4x1xf32>
    %26 = arith.cmpf oeq, %22, %25 : vector<4x1xf32>
    %cst_8 = arith.constant 6.250000e-02 : f32
    %27 = vector.broadcast %cst_8 : f32 to vector<4x1xf32>
    %28 = arith.select %26, %27, %23 : vector<4x1xi1>, vector<4x1xf32>
    %cst_9 = arith.constant 0.000000e+00 : f32
    %29 = vector.broadcast %cst_9 : f32 to vector<4x1xf32>
    %30 = arith.cmpf oeq, %22, %29 : vector<4x1xf32>
    %cst_10 = arith.constant 1.250000e-01 : f32
    %31 = vector.broadcast %cst_10 : f32 to vector<4x1xf32>
    %32 = arith.select %30, %31, %24 : vector<4x1xi1>, vector<4x1xf32>
    %cst_11 = arith.constant 1.000000e+00 : f32
    %33 = vector.broadcast %cst_11 : f32 to vector<4x1xf32>
    %34 = arith.cmpf oeq, %22, %33 : vector<4x1xf32>
    %cst_12 = arith.constant 2.187500e-01 : f32
    %35 = vector.broadcast %cst_12 : f32 to vector<4x1xf32>
    %36 = arith.select %34, %35, %28 : vector<4x1xi1>, vector<4x1xf32>
    %cst_13 = arith.constant 1.000000e+00 : f32
    %37 = vector.broadcast %cst_13 : f32 to vector<4x1xf32>
    %38 = arith.cmpf oeq, %22, %37 : vector<4x1xf32>
    %cst_14 = arith.constant 7.812500e-02 : f32
    %39 = vector.broadcast %cst_14 : f32 to vector<4x1xf32>
    %40 = arith.select %38, %39, %32 : vector<4x1xi1>, vector<4x1xf32>
    %c0 = arith.constant 0 : index
    %c4 = arith.constant 4 : index
    %c0_15 = arith.constant 0 : index
    %41 = vector.load %arg1[%c0, %c4, %c0_15] : memref<4x8x128xf32, #tpu.memory_space<vmem>>, vector<4x1x128xf32>
    %42 = vector.shape_cast %41 : vector<4x1x128xf32> to vector<4x128xf32>
    %43 = arith.negf %42 : vector<4x128xf32>
    %44 = math.exp %43 : vector<4x128xf32>
    %cst_16 = arith.constant 1.000000e+00 : f32
    %45 = vector.broadcast %cst_16 : f32 to vector<4x128xf32>
    %46 = arith.addf %45, %44 : vector<4x128xf32>
    %47 = arith.divf %45, %46 : vector<4x128xf32>
    %c0_17 = arith.constant 0 : index
    %c0_18 = arith.constant 0 : index
    %c0_19 = arith.constant 0 : index
    %48 = vector.load %arg1[%c0_17, %c0_18, %c0_19] : memref<4x8x128xf32, #tpu.memory_space<vmem>>, vector<4x1x128xf32>
    %49 = vector.shape_cast %48 : vector<4x1x128xf32> to vector<4x128xf32>
    %50 = arith.negf %49 : vector<4x128xf32>
    %51 = math.exp %50 : vector<4x128xf32>
    %cst_20 = arith.constant 1.000000e+00 : f32
    %52 = vector.broadcast %cst_20 : f32 to vector<4x128xf32>
    %53 = arith.addf %52, %51 : vector<4x128xf32>
    %54 = arith.divf %52, %53 : vector<4x128xf32>
    %55 = vector.broadcast %12 : vector<1x128xf32> to vector<4x128xf32>
    %56 = arith.addf %54, %55 : vector<4x128xf32>
    %cst_21 = arith.constant 6.250000e-02 : f32
    %57 = vector.broadcast %cst_21 : f32 to vector<4x128xf32>
    %58 = arith.mulf %56, %57 : vector<4x128xf32>
    %c0_22 = arith.constant 0 : index
    %c0_23 = arith.constant 0 : index
    %59 = vector.load %arg2[%c0_22, %c0_23] : memref<20x128xf32, #tpu.memory_space<vmem>>, vector<4x128xf32>
    tpu.vector_store %arg2[%c0_22, %c0_23], %58 {strides = array<i32>} : memref<20x128xf32, #tpu.memory_space<vmem>>, vector<4x128xf32>,
    %c0_24 = arith.constant 0 : index
    %c1 = arith.constant 1 : index
    %c0_25 = arith.constant 0 : index
    %60 = vector.load %arg1[%c0_24, %c1, %c0_25] : memref<4x8x128xf32, #tpu.memory_space<vmem>>, vector<4x1x128xf32>
    %61 = vector.shape_cast %60 : vector<4x1x128xf32> to vector<4x128xf32>
    %62 = arith.negf %61 : vector<4x128xf32>
    %63 = math.exp %62 : vector<4x128xf32>
    %cst_26 = arith.constant 1.000000e+00 : f32
    %64 = vector.broadcast %cst_26 : f32 to vector<4x128xf32>
    %65 = arith.addf %64, %63 : vector<4x128xf32>
    %66 = arith.divf %64, %65 : vector<4x128xf32>
    %67 = vector.broadcast %9 : vector<1x128xf32> to vector<4x128xf32>
    %68 = arith.addf %66, %67 : vector<4x128xf32>
    %cst_27 = arith.constant 6.250000e-02 : f32
    %69 = vector.broadcast %cst_27 : f32 to vector<4x128xf32>
    %70 = arith.mulf %68, %69 : vector<4x128xf32>
    %c4_28 = arith.constant 4 : index
    %c0_29 = arith.constant 0 : index
    %71 = vector.load %arg2[%c4_28, %c0_29] : memref<20x128xf32, #tpu.memory_space<vmem>>, vector<4x128xf32>
    tpu.vector_store %arg2[%c4_28, %c0_29], %70 {strides = array<i32>} : memref<20x128xf32, #tpu.memory_space<vmem>>, vector<4x128xf32>,
    %c0_30 = arith.constant 0 : index
    %c2 = arith.constant 2 : index
    %c0_31 = arith.constant 0 : index
    %72 = vector.load %arg1[%c0_30, %c2, %c0_31] : memref<4x8x128xf32, #tpu.memory_space<vmem>>, vector<4x1x128xf32>
    %73 = vector.shape_cast %72 : vector<4x1x128xf32> to vector<4x128xf32>
    %74 = math.exp %73 : vector<4x128xf32>
    %75 = vector.broadcast %36 : vector<4x1xf32> to vector<4x128xf32>
    %76 = arith.mulf %74, %75 : vector<4x128xf32>
    %c8 = arith.constant 8 : index
    %c0_32 = arith.constant 0 : index
    %77 = vector.load %arg2[%c8, %c0_32] : memref<20x128xf32, #tpu.memory_space<vmem>>, vector<4x128xf32>
    tpu.vector_store %arg2[%c8, %c0_32], %76 {strides = array<i32>} : memref<20x128xf32, #tpu.memory_space<vmem>>, vector<4x128xf32>,
    %c0_33 = arith.constant 0 : index
    %c3 = arith.constant 3 : index
    %c0_34 = arith.constant 0 : index
    %78 = vector.load %arg1[%c0_33, %c3, %c0_34] : memref<4x8x128xf32, #tpu.memory_space<vmem>>, vector<4x1x128xf32>
    %79 = vector.shape_cast %78 : vector<4x1x128xf32> to vector<4x128xf32>
    %80 = math.exp %79 : vector<4x128xf32>
    %81 = vector.broadcast %40 : vector<4x1xf32> to vector<4x128xf32>
    %82 = arith.mulf %80, %81 : vector<4x128xf32>
    %c12 = arith.constant 12 : index
    %c0_35 = arith.constant 0 : index
    %83 = vector.load %arg2[%c12, %c0_35] : memref<20x128xf32, #tpu.memory_space<vmem>>, vector<4x128xf32>
    tpu.vector_store %arg2[%c12, %c0_35], %82 {strides = array<i32>} : memref<20x128xf32, #tpu.memory_space<vmem>>, vector<4x128xf32>,
    %c16 = arith.constant 16 : index
    %c0_36 = arith.constant 0 : index
    %84 = vector.load %arg2[%c16, %c0_36] : memref<20x128xf32, #tpu.memory_space<vmem>>, vector<4x128xf32>
    tpu.vector_store %arg2[%c16, %c0_36], %47 {strides = array<i32>} : memref<20x128xf32, #tpu.memory_space<vmem>>, vector<4x128xf32>,
    return
  }
  func.func @transform_0(%arg0: i32) -> (i32, i32, i32) {
    %c0_i32 = arith.constant 0 : i32
    %c0_i32_0 = arith.constant 0 : i32
    %c0_i32_1 = arith.constant 0 : i32
    return %c0_i32, %c0_i32_0, %arg0 : i32, i32, i32
  }
  func.func @transform_1(%arg0: i32) -> (i32, i32) {
    %c0_i32 = arith.constant 0 : i32
    %c0_i32_0 = arith.constant 0 : i32
    return %c0_i32, %arg0 : i32, i32
  }
}

</mosaic_0001>

<llo_original>
// kernel: tpu_custom_call.1
$region0: #{tpu_custom_call.1}
  #allocation0 [shape = 'u32[]', space=smem, size = 0x4, offset = 0x4, fixed_abs, tag = 'smem constant byte address 0x4 - core index']
  #allocation1 [shape = 'u32[72,128]{1,0:T(1,128)}', space=vmem, size = 0x9000, scoped, tag = 'internal scratch']
  %s0 = inlined_call_operand.hbm [shape: f32[4,8,256], index: 0, kind: input, shape index: {}]
  %s1 = inlined_call_operand.hbm [shape: f32[20,256], index: 1, kind: output, shape index: {}]
  %s2 = sld [smem:[#allocation0]]
  $region41: #{tpu_custom_call.1} parent=0
    _
  %s4 = ssub.s32 1, %s2
  %s5 = scalar_select 0, %s4, %s2
  $region1: #{tpu_custom_call.1} parent=0
    #allocation2 [shape = 'u8[32768]{0}', space=vmem, size = 0x8000, scoped, tag = 'input window, operand 0']
    #allocation3 [shape = 's32[2]{0}', space=sflag, size = 0x8, scoped, tag = 'scoped memory for tpu_custom_call.1']
    #allocation4 [shape = 's32[2]{0}', space=sflag, size = 0x8, scoped, tag = 'scoped memory for tpu_custom_call.1']
    #allocation5 [shape = 'u8[24576]{0}', space=vmem, size = 0x6000, scoped, tag = 'output window, operand 0']
    %6 = vsyncpa [#allocation3], 0
    %s7 = scalar_lea.sflag [#allocation3], 1
    %8 = vsyncpa %s7, 0
    %9 = vsyncpa [#allocation4], 0
    %s10 = scalar_lea.sflag [#allocation4], 1
    %11 = vsyncpa %s10, 0
    loop: start=0, step=1, limit=4
    $region2: #{tpu_custom_call.1} parent=1 // loop_pre_header
      _
    $region3: #{tpu_custom_call.1} parent=1 // loop_header
      %s13 = sphi 0, %s17
      %p14 = scmp.ge.s32.totalorder %s13, 4
      %s23 = sphi 0, %s25
      %s26 = sphi 0, %s23
      %s27 = sphi 0, %s26
      %s43 = sphi 0, %s27
      %s49 = sphi 0, %s51
      %s52 = sphi 0, %s49
      %s53 = sphi 0, %s52
      %s69 = sphi 0, %s53
    $region4: #{tpu_custom_call.1} parent=1 // loop_header_branch
      %16 = sbr.rel (%p14) target = $region8
    $region5: #{tpu_custom_call.1} parent=1 // loop_body
      %s18 = ssub.s32 %s13, 1
      %s19 = ssub.s32 %s13, 2
      %s20 = sadd.s32 %s13, 1
      %s21 = ssub.s32 %s13, %s20
      %p22 = scmp.eq.s32.totalorder %s21, 0
      %s24 = sadd.s32 %s23, 1
      %s25 = scalar_select %p22, %s23, %s24
      %p28 = pneg %p22
      %p29 = scmp.eq.s32.totalorder %s13, 1
      %p30 = por %p28, %p29
      %p31 = scmp.ne.s32.totalorder %s23, %s26
      %p32 = scmp.eq.s32.totalorder %s13, 0
      %p33 = por %p31, %p32
      %p34 = scmp.ne.s32.totalorder %s23, %s26
      %p35 = scmp.eq.s32.totalorder %s18, 1
      %p36 = por %p34, %p35
      %p37 = scmp.ne.s32.totalorder %s26, %s27
      %p38 = scmp.eq.s32.totalorder %s18, 0
      %p39 = por %p37, %p38
      %p40 = scmp.ne.s32.totalorder %s26, %s27
      %p41 = scmp.eq.s32.totalorder %s19, 1
      %p42 = por %p40, %p41
      %p44 = scmp.ne.s32.totalorder %s27, %s43
      %p45 = scmp.eq.s32.totalorder %s19, 0
      %p46 = por %p44, %p45
      %s47 = ssub.s32 %s13, %s20
      %p48 = scmp.eq.s32.totalorder %s47, 0
      %s50 = sadd.s32 %s49, 1
      %s51 = scalar_select %p48, %s49, %s50
      %p54 = pneg %p48
      %p55 = scmp.eq.s32.totalorder %s13, 1
      %p56 = por %p54, %p55
      %p57 = scmp.ne.s32.totalorder %s49, %s52
      %p58 = scmp.eq.s32.totalorder %s13, 0
      %p59 = por %p57, %p58
      %p60 = scmp.ne.s32.totalorder %s49, %s52
      %p61 = scmp.eq.s32.totalorder %s18, 1
      %p62 = por %p60, %p61
      %p63 = scmp.ne.s32.totalorder %s52, %s53
      %p64 = scmp.eq.s32.totalorder %s18, 0
      %p65 = por %p63, %p64
      %p66 = scmp.ne.s32.totalorder %s52, %s53
      %p67 = scmp.eq.s32.totalorder %s19, 1
      %p68 = por %p66, %p67
      %p70 = scmp.ne.s32.totalorder %s53, %s69
      %p71 = scmp.eq.s32.totalorder %s19, 0
      %p72 = por %p70, %p71
      %p73 = scmp.le.s32.totalorder 1, %s13
      %p74 = scmp.lt.s32.totalorder %s13, 3
      %p75 = pnand %p73, %p74
      %p76 = pneg %p75
      // Predicated region
      $region9: #{tpu_custom_call.1} parent=5 // pred_check
        _
      $region10: #{tpu_custom_call.1} parent=5 // pred_check_branch
        %78 = sbr.rel (%p75) target = $region12
      $region11: #{tpu_custom_call.1} parent=5 // pred_region
        %s79 = ssub.s32 %s13, 1
      $region12: #{tpu_custom_call.1} parent=5 // pred_fallthru
        _
      %p80 = scmp.lt.s32.totalorder %s13, 2
      // Predicated region
      $region13: #{tpu_custom_call.1} parent=5 // pred_check
        %p81 = pneg %p80
      $region14: #{tpu_custom_call.1} parent=5 // pred_check_branch
        %83 = sbr.rel (%p81) target = $region16
      $region15: #{tpu_custom_call.1} parent=5 // pred_region
        // Predicated region
        $region17: #{tpu_custom_call.1} parent=15 // pred_check
          %p84 = pneg %p33
        $region18: #{tpu_custom_call.1} parent=15 // pred_check_branch
          %86 = sbr.rel (%p84) target = $region20
        $region19: #{tpu_custom_call.1} parent=15 // pred_region
          %s87 = sand.u32 %s23, 1
          %s88 = scalar_lea.sflag [#allocation3], %s87
          %s89 = sand.u32 %s23, 1
          %s90 = smul.addr %s89, 32
          %s91 = scalar_lea.vmem [#allocation2], %s90
          %93 = vsyncadd %s88, 0
          %s94 = smul.addr %s13, 8
          %s95 = scalar_lea.hbm %s0, %s94
          %s96 = sshll.u32 %s95, 4
          %s97 = int_to_ptr.hbm [resolvable:$true] %s96
          %s98 = sshll.u32 %s91, 4
          %s99 = int_to_ptr.vmem [resolvable:$true] %s98
          %104 = dma.hbm_to_vmem [thread:$0]  %s97, 512, %s99, %s88, 256, 128, 8
        $region20: #{tpu_custom_call.1} parent=15 // pred_fallthru
          _
      $region16: #{tpu_custom_call.1} parent=5 // pred_fallthru
        _
      %p105 = scmp.le.s32.totalorder 1, %s13
      %p106 = scmp.lt.s32.totalorder %s13, 3
      %p107 = pnand %p105, %p106
      %p108 = pneg %p107
      // Predicated region
      $region21: #{tpu_custom_call.1} parent=5 // pred_check
        _
      $region22: #{tpu_custom_call.1} parent=5 // pred_check_branch
        %110 = sbr.rel (%p107) target = $region24
      $region23: #{tpu_custom_call.1} parent=5 // pred_region
        %s111 = ssub.s32 %s13, 1
        %s112 = sand.u32 %s26, 1
        %s113 = scalar_lea.sflag [#allocation3], %s112
        %s114 = sand.u32 %s26, 1
        %s115 = smul.addr %s114, 32
        %s116 = scalar_lea.vmem [#allocation2], %s115
        // Predicated region
        $region25: #{tpu_custom_call.1} parent=23 // pred_check
          %p117 = pneg %p39
        $region26: #{tpu_custom_call.1} parent=23 // pred_check_branch
          %119 = sbr.rel (%p117) target = $region28
        $region27: #{tpu_custom_call.1} parent=23 // pred_region
          %121 = dma.done %s113, 512
        $region28: #{tpu_custom_call.1} parent=23 // pred_fallthru
          _
        %s122 = sand.u32 %s26, 1
        %s123 = scalar_lea.sflag [#allocation3], %s122
        %s124 = sand.u32 %s26, 1
        %s125 = smul.addr %s124, 32
        %s126 = scalar_lea.vmem [#allocation2], %s125
        %p127 = pneg %p39
        %p128 = pneg %p36
        %p129 = pneg %p65
        %p130 = pneg %p62
        %s131 = sand.u32 %s52, 1
        %s132 = scalar_lea.sflag [#allocation4], %s131
        %s133 = sand.u32 %s52, 1
        %s134 = smul.addr %s133, 24
        %s135 = scalar_lea.vmem [#allocation5], %s134
        %s136 = smul.u32 %s18, 128
        %v137 = vlaneseq
        %v138 = vand.u32 %v137, 127
        %v139 = vstv %s136
        %v140 = vadd.s32 %v139, %v138
        %v141 = vcvt.s32.f32 %v140
        %v142 = vadd.f32 %v141, 0.5
        %v143 = vmul.f32 %v142, 0.0625
        %v144 = vfloor.f32 %v143
        %v145 = vmul.f32 %v144, 16.0
        %v146 = vsub.f32 %v141, %v145
        %v147 = vlaneseq
        %v148 = vshrl.u32 %v147, 7
        %v149 = vcvt.s32.f32 %v148
        %v150 = vadd.f32 %v149, 0.5
        %v151 = vmul.f32 %v150, 0.5
        %v152 = vfloor.f32 %v151
        %v153 = vmul.f32 %v152, 2.0
        %v154 = vsub.f32 %v149, %v153
        %vm155 = vcmp.eq.f32.partialorder %v154, 0.0
        %v156 = vsel %vm155, 0.0625, 0.0
        %v157 = vsel %vm155, 0.125, 0.0
        %vm158 = vcmp.eq.f32.partialorder %v154, 1.0
        %v159 = vsel %vm158, 0.21875, %v156
        %v160 = vsel %vm158, 0.078125, %v157
        %v161 = vld [vmem:[%s116 + $0x4] sm:$0x1]
        %v162 = vld [vmem:[%s116 + $0xc] sm:$0x1]
        %v163 = vld [vmem:[%s116 + $0x14] sm:$0x1]
        %v164 = vld [vmem:[%s116 + $0x1c] sm:$0x1]
        %v165 = vxor.u32 %v161, 2147483648
        %v166 = vxor.u32 %v162, 2147483648
        %v167 = vxor.u32 %v163, 2147483648
        %v168 = vxor.u32 %v164, 2147483648
        %v169 = vmul.f32 %v165, 1.442695
        %v170 = vpow.pop %v169
        %v171 = vmul.f32 %v166, 1.442695
        %v172 = vpow.pop %v171
        %v173 = vmul.f32 %v167, 1.442695
        %v174 = vpow.pop %v173
        %v175 = vmul.f32 %v168, 1.442695
        %v176 = vpow.pop %v175
        %v177 = vadd.f32 %v170, 1.0
        %v178 = vadd.f32 %v172, 1.0
        %v179 = vadd.f32 %v174, 1.0
        %v180 = vadd.f32 %v176, 1.0
        %v181 = vrcp.pop %v177
        %v182 = vmul.f32 %v177, %v181
        %v183 = vsub.f32 1.0, %v182
        %v184 = vmul.f32 %v181, %v183
        %v185 = vadd.f32 %v181, %v184
        %vm186 = vweird.f32 %v177
        %vm187 = vweird.f32 %v181
        %vm188 = vmor %vm186, %vm187
        %v189 = vsel %vm188, %v181, %v185
        %v190 = vand.u32 2147483647, %v177
        %vm191 = vcmp.eq.f32.partialorder %v190, 8.507059e+37
        %v192 = vand.u32 %v177, 2147483648
        %v193 = vor.u32 1.1754944e-38, %v192
        %v194 = vsel %vm191, %v193, %v189
        %v195 = vmul.f32 1.0, %v194
        %v196 = vrcp.pop %v178
        %v197 = vmul.f32 %v178, %v196
        %v198 = vsub.f32 1.0, %v197
        %v199 = vmul.f32 %v196, %v198
        %v200 = vadd.f32 %v196, %v199
        %vm201 = vweird.f32 %v178
        %vm202 = vweird.f32 %v196
        %vm203 = vmor %vm201, %vm202
        %v204 = vsel %vm203, %v196, %v200
        %v205 = vand.u32 2147483647, %v178
        %vm206 = vcmp.eq.f32.partialorder %v205, 8.507059e+37
        %v207 = vand.u32 %v178, 2147483648
        %v208 = vor.u32 1.1754944e-38, %v207
        %v209 = vsel %vm206, %v208, %v204
        %v210 = vmul.f32 1.0, %v209
        %v211 = vrcp.pop %v179
        %v212 = vmul.f32 %v179, %v211
        %v213 = vsub.f32 1.0, %v212
        %v214 = vmul.f32 %v211, %v213
        %v215 = vadd.f32 %v211, %v214
        %vm216 = vweird.f32 %v179
        %vm217 = vweird.f32 %v211
        %vm218 = vmor %vm216, %vm217
        %v219 = vsel %vm218, %v211, %v215
        %v220 = vand.u32 2147483647, %v179
        %vm221 = vcmp.eq.f32.partialorder %v220, 8.507059e+37
        %v222 = vand.u32 %v179, 2147483648
        %v223 = vor.u32 1.1754944e-38, %v222
        %v224 = vsel %vm221, %v223, %v219
        %v225 = vmul.f32 1.0, %v224
        %v226 = vrcp.pop %v180
        %v227 = vmul.f32 %v180, %v226
        %v228 = vsub.f32 1.0, %v227
        %v229 = vmul.f32 %v226, %v228
        %v230 = vadd.f32 %v226, %v229
        %vm231 = vweird.f32 %v180
        %vm232 = vweird.f32 %v226
        %vm233 = vmor %vm231, %vm232
        %v234 = vsel %vm233, %v226, %v230
        %v235 = vand.u32 2147483647, %v180
        %vm236 = vcmp.eq.f32.partialorder %v235, 8.507059e+37
        %v237 = vand.u32 %v180, 2147483648
        %v238 = vor.u32 1.1754944e-38, %v237
        %v239 = vsel %vm236, %v238, %v234
        %v240 = vmul.f32 1.0, %v239
        %v241 = vld [vmem:[%s116] sm:$0x1]
        %v242 = vld [vmem:[%s116 + $0x8] sm:$0x1]
        %v243 = vld [vmem:[%s116 + $0x10] sm:$0x1]
        %v244 = vld [vmem:[%s116 + $0x18] sm:$0x1]
        %v245 = vxor.u32 %v241, 2147483648
        %v246 = vxor.u32 %v242, 2147483648
        %v247 = vxor.u32 %v243, 2147483648
        %v248 = vxor.u32 %v244, 2147483648
        %v249 = vmul.f32 %v245, 1.442695
        %v250 = vpow.pop %v249
        %v251 = vmul.f32 %v246, 1.442695
        %v252 = vpow.pop %v251
        %v253 = vmul.f32 %v247, 1.442695
        %v254 = vpow.pop %v253
        %v255 = vmul.f32 %v248, 1.442695
        %v256 = vpow.pop %v255
        %v257 = vadd.f32 %v250, 1.0
        %v258 = vadd.f32 %v252, 1.0
        %v259 = vadd.f32 %v254, 1.0
        %v260 = vadd.f32 %v256, 1.0
        %v261 = vrcp.pop %v257
        %v262 = vmul.f32 %v257, %v261
        %v263 = vsub.f32 1.0, %v262
        %v264 = vmul.f32 %v261, %v263
        %v265 = vadd.f32 %v261, %v264
        %vm266 = vweird.f32 %v257
        %vm267 = vweird.f32 %v261
        %vm268 = vmor %vm266, %vm267
        %v269 = vsel %vm268, %v261, %v265
        %v270 = vand.u32 2147483647, %v257
        %vm271 = vcmp.eq.f32.partialorder %v270, 8.507059e+37
        %v272 = vand.u32 %v257, 2147483648
        %v273 = vor.u32 1.1754944e-38, %v272
        %v274 = vsel %vm271, %v273, %v269
        %v275 = vmul.f32 1.0, %v274
        %v276 = vrcp.pop %v258
        %v277 = vmul.f32 %v258, %v276
        %v278 = vsub.f32 1.0, %v277
        %v279 = vmul.f32 %v276, %v278
        %v280 = vadd.f32 %v276, %v279
        %vm281 = vweird.f32 %v258
        %vm282 = vweird.f32 %v276
        %vm283 = vmor %vm281, %vm282
        %v284 = vsel %vm283, %v276, %v280
        %v285 = vand.u32 2147483647, %v258
        %vm286 = vcmp.eq.f32.partialorder %v285, 8.507059e+37
        %v287 = vand.u32 %v258, 2147483648
        %v288 = vor.u32 1.1754944e-38, %v287
        %v289 = vsel %vm286, %v288, %v284
        %v290 = vmul.f32 1.0, %v289
        %v291 = vrcp.pop %v259
        %v292 = vmul.f32 %v259, %v291
        %v293 = vsub.f32 1.0, %v292
        %v294 = vmul.f32 %v291, %v293
        %v295 = vadd.f32 %v291, %v294
        %vm296 = vweird.f32 %v259
        %vm297 = vweird.f32 %v291
        %vm298 = vmor %vm296, %vm297
        %v299 = vsel %vm298, %v291, %v295
        %v300 = vand.u32 2147483647, %v259
        %vm301 = vcmp.eq.f32.partialorder %v300, 8.507059e+37
        %v302 = vand.u32 %v259, 2147483648
        %v303 = vor.u32 1.1754944e-38, %v302
        %v304 = vsel %vm301, %v303, %v299
        %v305 = vmul.f32 1.0, %v304
        %v306 = vrcp.pop %v260
        %v307 = vmul.f32 %v260, %v306
        %v308 = vsub.f32 1.0, %v307
        %v309 = vmul.f32 %v306, %v308
        %v310 = vadd.f32 %v306, %v309
        %vm311 = vweird.f32 %v260
        %vm312 = vweird.f32 %v306
        %vm313 = vmor %vm311, %vm312
        %v314 = vsel %vm313, %v306, %v310
        %v315 = vand.u32 2147483647, %v260
        %vm316 = vcmp.eq.f32.partialorder %v315, 8.507059e+37
        %v317 = vand.u32 %v260, 2147483648
        %v318 = vor.u32 1.1754944e-38, %v317
        %v319 = vsel %vm316, %v318, %v314
        %v320 = vmul.f32 1.0, %v319
        %v321 = vadd.f32 %v275, %v146
        %v322 = vadd.f32 %v290, %v146
        %v323 = vadd.f32 %v305, %v146
        %v324 = vadd.f32 %v320, %v146
        %v325 = vmul.f32 %v321, 0.0625
        %v326 = vmul.f32 %v322, 0.0625
        %v327 = vmul.f32 %v323, 0.0625
        %v328 = vmul.f32 %v324, 0.0625
        %v333 = vrot.slane %v326, 7
        %vm334 = vcmask 1041409
        %v335 = vsel %vm334, %v333, %v325
        %v336 = vrot.slane %v327, 6
        %vm337 = vcmask 1042434
        %v338 = vsel %vm337, %v336, %v335
        %v339 = vrot.slane %v328, 5
        %vm340 = vcmask 1043459
        %v341 = vsel %vm340, %v339, %v338
        %343 = vst [vmem:[%s135] sm:$0xf] %v341
        %v344 = vld [vmem:[%s116 + $0x1] sm:$0x1]
        %v345 = vld [vmem:[%s116 + $0x9] sm:$0x1]
        %v346 = vld [vmem:[%s116 + $0x11] sm:$0x1]
        %v347 = vld [vmem:[%s116 + $0x19] sm:$0x1]
        %v348 = vxor.u32 %v344, 2147483648
        %v349 = vxor.u32 %v345, 2147483648
        %v350 = vxor.u32 %v346, 2147483648
        %v351 = vxor.u32 %v347, 2147483648
        %v352 = vmul.f32 %v348, 1.442695
        %v353 = vpow.pop %v352
        %v354 = vmul.f32 %v349, 1.442695
        %v355 = vpow.pop %v354
        %v356 = vmul.f32 %v350, 1.442695
        %v357 = vpow.pop %v356
        %v358 = vmul.f32 %v351, 1.442695
        %v359 = vpow.pop %v358
        %v360 = vadd.f32 %v353, 1.0
        %v361 = vadd.f32 %v355, 1.0
        %v362 = vadd.f32 %v357, 1.0
        %v363 = vadd.f32 %v359, 1.0
        %v364 = vrcp.pop %v360
        %v365 = vmul.f32 %v360, %v364
        %v366 = vsub.f32 1.0, %v365
        %v367 = vmul.f32 %v364, %v366
        %v368 = vadd.f32 %v364, %v367
        %vm369 = vweird.f32 %v360
        %vm370 = vweird.f32 %v364
        %vm371 = vmor %vm369, %vm370
        %v372 = vsel %vm371, %v364, %v368
        %v373 = vand.u32 2147483647, %v360
        %vm374 = vcmp.eq.f32.partialorder %v373, 8.507059e+37
        %v375 = vand.u32 %v360, 2147483648
        %v376 = vor.u32 1.1754944e-38, %v375
        %v377 = vsel %vm374, %v376, %v372
        %v378 = vmul.f32 1.0, %v377
        %v379 = vrcp.pop %v361
        %v380 = vmul.f32 %v361, %v379
        %v381 = vsub.f32 1.0, %v380
        %v382 = vmul.f32 %v379, %v381
        %v383 = vadd.f32 %v379, %v382
        %vm384 = vweird.f32 %v361
        %vm385 = vweird.f32 %v379
        %vm386 = vmor %vm384, %vm385
        %v387 = vsel %vm386, %v379, %v383
        %v388 = vand.u32 2147483647, %v361
        %vm389 = vcmp.eq.f32.partialorder %v388, 8.507059e+37
        %v390 = vand.u32 %v361, 2147483648
        %v391 = vor.u32 1.1754944e-38, %v390
        %v392 = vsel %vm389, %v391, %v387
        %v393 = vmul.f32 1.0, %v392
        %v394 = vrcp.pop %v362
        %v395 = vmul.f32 %v362, %v394
        %v396 = vsub.f32 1.0, %v395
        %v397 = vmul.f32 %v394, %v396
        %v398 = vadd.f32 %v394, %v397
        %vm399 = vweird.f32 %v362
        %vm400 = vweird.f32 %v394
        %vm401 = vmor %vm399, %vm400
        %v402 = vsel %vm401, %v394, %v398
        %v403 = vand.u32 2147483647, %v362
        %vm404 = vcmp.eq.f32.partialorder %v403, 8.507059e+37
        %v405 = vand.u32 %v362, 2147483648
        %v406 = vor.u32 1.1754944e-38, %v405
        %v407 = vsel %vm404, %v406, %v402
        %v408 = vmul.f32 1.0, %v407
        %v409 = vrcp.pop %v363
        %v410 = vmul.f32 %v363, %v409
        %v411 = vsub.f32 1.0, %v410
        %v412 = vmul.f32 %v409, %v411
        %v413 = vadd.f32 %v409, %v412
        %vm414 = vweird.f32 %v363
        %vm415 = vweird.f32 %v409
        %vm416 = vmor %vm414, %vm415
        %v417 = vsel %vm416, %v409, %v413
        %v418 = vand.u32 2147483647, %v363
        %vm419 = vcmp.eq.f32.partialorder %v418, 8.507059e+37
        %v420 = vand.u32 %v363, 2147483648
        %v421 = vor.u32 1.1754944e-38, %v420
        %v422 = vsel %vm419, %v421, %v417
        %v423 = vmul.f32 1.0, %v422
        %v424 = vadd.f32 %v378, %v144
        %v425 = vadd.f32 %v393, %v144
        %v426 = vadd.f32 %v408, %v144
        %v427 = vadd.f32 %v423, %v144
        %v428 = vmul.f32 %v424, 0.0625
        %v429 = vmul.f32 %v425, 0.0625
        %v430 = vmul.f32 %v426, 0.0625
        %v431 = vmul.f32 %v427, 0.0625
        %v436 = vrot.slane %v429, 7
        %v437 = vsel %vm334, %v436, %v428
        %v438 = vrot.slane %v430, 6
        %v439 = vsel %vm337, %v438, %v437
        %v440 = vrot.slane %v431, 5
        %v441 = vsel %vm340, %v440, %v439
        %443 = vst [vmem:[%s135 + $0x4] sm:$0xf] %v441
        %v444 = vld [vmem:[%s116 + $0x2] sm:$0x1]
        %v445 = vld [vmem:[%s116 + $0xa] sm:$0x1]
        %v446 = vld [vmem:[%s116 + $0x12] sm:$0x1]
        %v447 = vld [vmem:[%s116 + $0x1a] sm:$0x1]
        %v448 = vmul.f32 %v444, 1.442695
        %v449 = vpow.pop %v448
        %v450 = vmul.f32 %v445, 1.442695
        %v451 = vpow.pop %v450
        %v452 = vmul.f32 %v446, 1.442695
        %v453 = vpow.pop %v452
        %v454 = vmul.f32 %v447, 1.442695
        %v455 = vpow.pop %v454
        %v457 = vrot.slane %v159, 1
        %v458 = vrot.slane %v159, 2
        %v459 = vrot.slane %v159, 3
        %v464 = vmul.f32 %v449, %v159
        %v465 = vmul.f32 %v451, %v457
        %v466 = vmul.f32 %v453, %v458
        %v467 = vmul.f32 %v455, %v459
        %v472 = vrot.slane %v465, 7
        %v473 = vsel %vm334, %v472, %v464
        %v474 = vrot.slane %v466, 6
        %v475 = vsel %vm337, %v474, %v473
        %v476 = vrot.slane %v467, 5
        %v477 = vsel %vm340, %v476, %v475
        %479 = vst [vmem:[%s135 + $0x8] sm:$0xf] %v477
        %v480 = vld [vmem:[%s116 + $0x3] sm:$0x1]
        %v481 = vld [vmem:[%s116 + $0xb] sm:$0x1]
        %v482 = vld [vmem:[%s116 + $0x13] sm:$0x1]
        %v483 = vld [vmem:[%s116 + $0x1b] sm:$0x1]
        %v484 = vmul.f32 %v480, 1.442695
        %v485 = vpow.pop %v484
        %v486 = vmul.f32 %v481, 1.442695
        %v487 = vpow.pop %v486
        %v488 = vmul.f32 %v482, 1.442695
        %v489 = vpow.pop %v488
        %v490 = vmul.f32 %v483, 1.442695
        %v491 = vpow.pop %v490
        %v493 = vrot.slane %v160, 1
        %v494 = vrot.slane %v160, 2
        %v495 = vrot.slane %v160, 3
        %v500 = vmul.f32 %v485, %v160
        %v501 = vmul.f32 %v487, %v493
        %v502 = vmul.f32 %v489, %v494
        %v503 = vmul.f32 %v491, %v495
        %v508 = vrot.slane %v501, 7
        %v509 = vsel %vm334, %v508, %v500
        %v510 = vrot.slane %v502, 6
        %v511 = vsel %vm337, %v510, %v509
        %v512 = vrot.slane %v503, 5
        %v513 = vsel %vm340, %v512, %v511
        %515 = vst [vmem:[%s135 + $0xc] sm:$0xf] %v513
        %v520 = vrot.slane %v210, 7
        %v521 = vsel %vm334, %v520, %v195
        %v522 = vrot.slane %v225, 6
        %v523 = vsel %vm337, %v522, %v521
        %v524 = vrot.slane %v240, 5
        %v525 = vsel %vm340, %v524, %v523
        %527 = vst [vmem:[%s135 + $0x10] sm:$0xf] %v525
        %s528 = sand.u32 %s52, 1
        %s529 = scalar_lea.sflag [#allocation4], %s528
        %s530 = sand.u32 %s52, 1
        %s531 = smul.addr %s530, 24
        %s532 = scalar_lea.vmem [#allocation5], %s531
        // Predicated region
        $region29: #{tpu_custom_call.1} parent=23 // pred_check
          %p533 = pneg %p62
        $region30: #{tpu_custom_call.1} parent=23 // pred_check_branch
          %535 = sbr.rel (%p533) target = $region32
        $region31: #{tpu_custom_call.1} parent=23 // pred_region
          %537 = vsyncadd %s529, 0
          %s538 = smul.addr %s18, 8
          %s539 = scalar_lea.hbm %s1, %s538
          %s540 = sshll.u32 %s532, 4
          %s541 = int_to_ptr.vmem [resolvable:$true] %s540
          %s542 = sshll.u32 %s539, 4
          %s543 = int_to_ptr.hbm [resolvable:$true] %s542
          %548 = dma.vmem_to_hbm [thread:$0]  %s541, 384, %s543, %s529, 128, 256, 8
        $region32: #{tpu_custom_call.1} parent=23 // pred_fallthru
          _
      $region24: #{tpu_custom_call.1} parent=5 // pred_fallthru
        _
      %p549 = scmp.le.s32.totalorder 2, %s13
      // Predicated region
      $region33: #{tpu_custom_call.1} parent=5 // pred_check
        %p550 = pneg %p549
      $region34: #{tpu_custom_call.1} parent=5 // pred_check_branch
        %552 = sbr.rel (%p550) target = $region36
      $region35: #{tpu_custom_call.1} parent=5 // pred_region
        %s553 = ssub.s32 %s13, 2
        // Predicated region
        $region37: #{tpu_custom_call.1} parent=35 // pred_check
          %p554 = pneg %p68
        $region38: #{tpu_custom_call.1} parent=35 // pred_check_branch
          %556 = sbr.rel (%p554) target = $region40
        $region39: #{tpu_custom_call.1} parent=35 // pred_region
          %s557 = sand.u32 %s53, 1
          %s558 = scalar_lea.sflag [#allocation4], %s557
          %s559 = sand.u32 %s53, 1
          %s560 = smul.addr %s559, 24
          %s561 = scalar_lea.vmem [#allocation5], %s560
          %563 = dma.done %s558, 384
        $region40: #{tpu_custom_call.1} parent=35 // pred_fallthru
          _
      $region36: #{tpu_custom_call.1} parent=5 // pred_fallthru
        _
    $region6: #{tpu_custom_call.1} parent=1 // loop_footer
      %s17 = sadd.s32 1, %s13
    $region7: #{tpu_custom_call.1} parent=1 // loop_footer_branch
      %12 = sbr.rel target = $region3
    $region8: #{tpu_custom_call.1} parent=1 // loop_exit
      _
    %564 = vsyncpa [#allocation3], 1
    %s565 = scalar_lea.sflag [#allocation3], 1
    %566 = vsyncpa %s565, 1
    %567 = vsyncpa [#allocation4], 1
    %s568 = scalar_lea.sflag [#allocation4], 1
    %569 = vsyncpa %s568, 1

</llo_original>
